<compile_context>
chip_gen: v5e
topology: v5e:2x2
jax: 0.10.0
libtpu: 0.0.40
codegen_flags: <defaults>
</compile_context>

<pallas_src>
import functools
import math

import jax
import jax.numpy as jnp
import numpy as np
from jax import lax
from jax.experimental import pallas as pl
from jax.experimental.pallas import tpu as pltpu

VMEM_LIMIT = 32 * 1024 * 1024  # explicit scoped-VMEM budget (fits v5e/v6e/v7x)


def _rmsnorm_f32(t, gain, eps):
    t = t.astype(jnp.float32)
    return t * lax.rsqrt(jnp.mean(t * t, axis=-1, keepdims=True) + eps) * gain


# -----------------------------------------------------------------------------
# 1) RMSNorm1 + fused Q/K/V projection (+ qk RMSNorm, + 1/sqrt(dk) folded into Q)
# -----------------------------------------------------------------------------
def qkv_kernel(x_ref, g1_ref, gqk_ref, w_ref, out_ref, *, eps, q_scale, compute_dtype):
    j = pl.program_id(1)                          # 0: Q, 1: K, 2: V

    h = _rmsnorm_f32(x_ref[...], g1_ref[...].astype(jnp.float32), eps)
    p = jnp.dot(h.astype(compute_dtype), w_ref[0],
                preferred_element_type=jnp.float32)           # (Tm, D) fp32

    @pl.when(j < 2)                               # Q and K get qk-RMSNorm
    def _():
        pn = _rmsnorm_f32(p, gqk_ref[...].astype(jnp.float32), eps)
        s = jnp.where(j == 0, jnp.float32(q_scale), jnp.float32(1.0))
        out_ref[0] = (pn * s).astype(out_ref.dtype)

    @pl.when(j == 2)                              # V passes through
    def _():
        out_ref[0] = p.astype(out_ref.dtype)


def qkv_proj(x2d, g1, gqk, wqkv, *, block_rows, dk, eps, compute_dtype):
    R, D = x2d.shape
    kernel = functools.partial(qkv_kernel, eps=eps, q_scale=1.0 / math.sqrt(dk),
                               compute_dtype=compute_dtype)
    return pl.pallas_call(
        kernel,
        out_shape=jax.ShapeDtypeStruct((3, R, D), compute_dtype),
        grid=(R // block_rows, 3),
        in_specs=[
            pl.BlockSpec((block_rows, D), lambda i, j: (i, 0)),   # x rows
            pl.BlockSpec((1, D), lambda i, j: (0, 0)),            # norm1 gain
            pl.BlockSpec((1, D), lambda i, j: (0, 0)),            # qk-norm gain
            pl.BlockSpec((1, D, D), lambda i, j: (j, 0, 0)),      # stacked WqT/WkT/WvT
        ],
        out_specs=pl.BlockSpec((1, block_rows, D), lambda i, j: (j, i, 0)),
        compiler_params=pltpu.CompilerParams(
            dimension_semantics=("parallel", "parallel"),
            vmem_limit_bytes=VMEM_LIMIT),
    )(x2d, g1, gqk, wqkv)


# -----------------------------------------------------------------------------
# 2) Causal flash attention over (batch*head, q tiles, kv tiles)
# -----------------------------------------------------------------------------
def flash_kernel(q_ref, k_ref, v_ref, o_ref, m_sc, l_sc, acc_sc,
                 *, block_q, block_kv, approx_recip):
    qi = pl.program_id(1)
    ki = pl.program_id(2)

    @pl.when(ki == 0)
    def _():
        m_sc[...] = jnp.full(m_sc.shape, -jnp.inf, jnp.float32)
        l_sc[...] = jnp.zeros(l_sc.shape, jnp.float32)
        acc_sc[...] = jnp.zeros(acc_sc.shape, jnp.float32)

    # Skip kv blocks that lie entirely in the causal future of this q block.
    @pl.when(ki * block_kv <= qi * block_q + (block_q - 1))
    def _():
        q = q_ref[0]                              # (Tq, dk)
        k = k_ref[0]                              # (Tkv, dk)
        v = v_ref[0]
        # (Tq, dk) x (Tkv, dk) -> (Tq, Tkv), contraction over dk (no transpose).
        s = lax.dot_general(q, k, (((1,), (1,)), ((), ())),
                            preferred_element_type=jnp.float32)
        row = qi * block_q + lax.broadcasted_iota(jnp.int32, s.shape, 0)
        col = ki * block_kv + lax.broadcasted_iota(jnp.int32, s.shape, 1)
        s = jnp.where(row >= col, s, -jnp.inf)    # 1/sqrt(dk) already folded into q

        m_prev = m_sc[...]
        m_new = jnp.maximum(m_prev, jnp.max(s, axis=-1, keepdims=True))
        alpha = jnp.exp(m_prev - m_new)
        p = jnp.exp(s - m_new)
        l_sc[...] = alpha * l_sc[...] + jnp.sum(p, axis=-1, keepdims=True)
        acc_sc[...] = alpha * acc_sc[...] + jnp.dot(
            p.astype(v.dtype), v, preferred_element_type=jnp.float32)
        m_sc[...] = m_new

    @pl.when(ki == pl.num_programs(2) - 1)
    def _():
        inv_l = pl.reciprocal(l_sc[...], approx=approx_recip)
        o_ref[0] = (acc_sc[...] * inv_l).astype(o_ref.dtype)


def flash_attention(q, k, v, *, block_q, block_kv, approx_recip):
    BH, S, dk = q.shape
    kernel = functools.partial(flash_kernel, block_q=block_q, block_kv=block_kv,
                               approx_recip=approx_recip)
    return pl.pallas_call(
        kernel,
        out_shape=jax.ShapeDtypeStruct((BH, S, dk), q.dtype),
        grid=(BH, S // block_q, S // block_kv),
        in_specs=[
            pl.BlockSpec((1, block_q, dk), lambda b, qi, ki: (b, qi, 0)),
            pl.BlockSpec((1, block_kv, dk), lambda b, qi, ki: (b, ki, 0)),
            pl.BlockSpec((1, block_kv, dk), lambda b, qi, ki: (b, ki, 0)),
        ],
        out_specs=pl.BlockSpec((1, block_q, dk), lambda b, qi, ki: (b, qi, 0)),
        scratch_shapes=[
            pltpu.VMEM((block_q, 1), jnp.float32),     # running max
            pltpu.VMEM((block_q, 1), jnp.float32),     # running denominator
            pltpu.VMEM((block_q, dk), jnp.float32),    # running accumulator
        ],
        compiler_params=pltpu.CompilerParams(
            dimension_semantics=("parallel", "parallel", "arbitrary"),
            vmem_limit_bytes=VMEM_LIMIT),
    )(q, k, v)


# -----------------------------------------------------------------------------
# 3) Output projection + first residual
# -----------------------------------------------------------------------------
def oproj_kernel(attn_ref, x_ref, wo_ref, y_ref):
    acc = jnp.dot(attn_ref[...], wo_ref[...], preferred_element_type=jnp.float32)
    y_ref[...] = (x_ref[...].astype(jnp.float32) + acc).astype(y_ref.dtype)


def out_proj_residual(attn2d, x2d, wo_t, *, block_rows, block_cols):
    R, D = x2d.shape
    return pl.pallas_call(
        oproj_kernel,
        out_shape=jax.ShapeDtypeStruct((R, D), x2d.dtype),
        grid=(R // block_rows, D // block_cols),
        in_specs=[
            pl.BlockSpec((block_rows, D), lambda i, j: (i, 0)),           # attn rows
            pl.BlockSpec((block_rows, block_cols), lambda i, j: (i, j)),  # residual x
            pl.BlockSpec((D, block_cols), lambda i, j: (0, j)),           # W_O^T tile
        ],
        out_specs=pl.BlockSpec((block_rows, block_cols), lambda i, j: (i, j)),
        compiler_params=pltpu.CompilerParams(
            dimension_semantics=("parallel", "parallel"),
            vmem_limit_bytes=VMEM_LIMIT),
    )(attn2d, x2d, wo_t)


# -----------------------------------------------------------------------------
# 4) RMSNorm2 + SwiGLU FFN (d_ff tiled, fp32 accumulator) + second residual
# -----------------------------------------------------------------------------
def ffn_kernel(y_ref, g2_ref, w1_ref, w3_ref, w2_ref, z_ref, h_sc, acc_sc,
               *, eps, compute_dtype):
    f = pl.program_id(1)

    @pl.when(f == 0)
    def _():
        h = _rmsnorm_f32(y_ref[...], g2_ref[...].astype(jnp.float32), eps)
        h_sc[...] = h.astype(h_sc.dtype)
        acc_sc[...] = jnp.zeros(acc_sc.shape, jnp.float32)

    h = h_sc[...]
    a = jnp.dot(h, w1_ref[...], preferred_element_type=jnp.float32)   # (Tm, Tf)
    b = jnp.dot(h, w3_ref[...], preferred_element_type=jnp.float32)
    gated = (a * (1.0 / (1.0 + jnp.exp(-a)))) * b                     # SiLU * gate, fp32
    acc_sc[...] += jnp.dot(gated.astype(compute_dtype), w2_ref[...],
                           preferred_element_type=jnp.float32)

    @pl.when(f == pl.num_programs(1) - 1)
    def _():
        z_ref[...] = (y_ref[...].astype(jnp.float32) + acc_sc[...]).astype(z_ref.dtype)


def ffn_block(y2d, g2, w1_t, w3_t, w2_t, *, block_rows, block_ff, eps, compute_dtype):
    R, D = y2d.shape
    F = w1_t.shape[1]
    kernel = functools.partial(ffn_kernel, eps=eps, compute_dtype=compute_dtype)
    return pl.pallas_call(
        kernel,
        out_shape=jax.ShapeDtypeStruct((R, D), y2d.dtype),
        grid=(R // block_rows, F // block_ff),
        in_specs=[
            pl.BlockSpec((block_rows, D), lambda i, f: (i, 0)),   # y rows
            pl.BlockSpec((1, D), lambda i, f: (0, 0)),            # norm2 gain
            pl.BlockSpec((D, block_ff), lambda i, f: (0, f)),     # W1^T tile
            pl.BlockSpec((D, block_ff), lambda i, f: (0, f)),     # W3^T tile
            pl.BlockSpec((block_ff, D), lambda i, f: (f, 0)),     # W2^T tile
        ],
        out_specs=pl.BlockSpec((block_rows, D), lambda i, f: (i, 0)),
        scratch_shapes=[
            pltpu.VMEM((block_rows, D), compute_dtype),   # normed activations
            pltpu.VMEM((block_rows, D), jnp.float32),     # fp32 accumulator
        ],
        compiler_params=pltpu.CompilerParams(
            dimension_semantics=("parallel", "arbitrary"),
            vmem_limit_bytes=VMEM_LIMIT),
    )(y2d, g2, w1_t, w3_t, w2_t)


# -----------------------------------------------------------------------------
# Full transformer block
# -----------------------------------------------------------------------------
def transformer_block_pallas(x, params, num_heads, *, eps=1e-5,
                             compute_dtype=jnp.float32,
                             block_rows=None, block_q=None, block_kv=None,
                             block_ff=None, block_out_cols=None,
                             approx_recip=True):
    B, S, D = x.shape
    F = params["W1"].shape[0]
    assert D % num_heads == 0
    dk = D // num_heads
    R = B * S

    if block_rows is None:
        block_rows = min(R, 256)
    if block_q is None:
        block_q = min(S, 256)
    if block_kv is None:
        block_kv = min(S, 256)
    if block_ff is None:
        block_ff = min(F, 512)
    if block_out_cols is None:
        block_out_cols = D if D <= 512 else 512

    assert R % block_rows == 0 and block_rows % 8 == 0
    assert S % block_q == 0 and block_q % 8 == 0
    assert S % block_kv == 0 and block_kv % 8 == 0
    assert F % block_ff == 0 and (block_ff % 128 == 0 or block_ff == F)
    assert D % block_out_cols == 0 and (block_out_cols % 128 == 0 or block_out_cols == D)

    cd = compute_dtype
    # Weights pre-transposed to (in, out) so kernels compute  act @ W^T.
    wqkv = jnp.stack([params["W_Q"].T, params["W_K"].T, params["W_V"].T]).astype(cd)
    wo_t = params["W_O"].T.astype(cd)
    w1_t = params["W1"].T.astype(cd)
    w3_t = params["W3"].T.astype(cd)
    w2_t = params["W2"].T.astype(cd)
    g1 = params["g1"].reshape(1, D).astype(jnp.float32)
    gqk = params["g_qk"].reshape(1, D).astype(jnp.float32)
    g2 = params["g2"].reshape(1, D).astype(jnp.float32)

    x2d = x.reshape(R, D)

    qkv = qkv_proj(x2d, g1, gqk, wqkv, block_rows=block_rows, dk=dk, eps=eps,
                   compute_dtype=cd)                       # (3, R, D)

    def to_heads(t):   # (R, D) -> (B*H, S, dk)  (layout plumbing done by XLA)
        return (t.reshape(B, S, num_heads, dk)
                 .transpose(0, 2, 1, 3)
                 .reshape(B * num_heads, S, dk))

    q, k, v = to_heads(qkv[0]), to_heads(qkv[1]), to_heads(qkv[2])

    attn = flash_attention(q, k, v, block_q=block_q, block_kv=block_kv,
                           approx_recip=approx_recip)      # (B*H, S, dk)

    attn2d = (attn.reshape(B, num_heads, S, dk)
                  .transpose(0, 2, 1, 3)
                  .reshape(R, D))

    y2d = out_proj_residual(attn2d, x2d, wo_t,
                            block_rows=block_rows, block_cols=block_out_cols)

    z2d = ffn_block(y2d, g2, w1_t, w3_t, w2_t,
                    block_rows=block_rows, block_ff=block_ff, eps=eps,
                    compute_dtype=cd)

    return z2d.reshape(B, S, D)


# -----------------------------------------------------------------------------
# Pure-JAX reference mirroring the PyTorch module (fp32, HIGHEST precision)
# -----------------------------------------------------------------------------
def transformer_block_reference(x, params, num_heads, eps=1e-5):
    B, S, D = x.shape
    dk = D // num_heads
    hp = jax.lax.Precision.HIGHEST

    def rmsnorm(t, g):
        t = t.astype(jnp.float32)
        rms = jnp.sqrt(jnp.mean(t * t, axis=-1, keepdims=True) + eps)
        return (t / rms) * g

    h = rmsnorm(x, params["g1"])
    q = jnp.dot(h, params["W_Q"].T, precision=hp)
    k = jnp.dot(h, params["W_K"].T, precision=hp)
    v = jnp.dot(h, params["W_V"].T, precision=hp)
    q = rmsnorm(q, params["g_qk"])
    k = rmsnorm(k, params["g_qk"])

    def split(t):
        return t.reshape(B, S, num_heads, dk).transpose(0, 2, 1, 3)

    q, k, v = split(q), split(k), split(v)
    scores = jnp.einsum("bhqd,bhkd->bhqk", q, k, precision=hp) / math.sqrt(dk)
    mask = jnp.tril(jnp.ones((S, S), dtype=bool))
    scores = jnp.where(mask, scores, -jnp.inf)
    m = jnp.max(scores, axis=-1, keepdims=True)
    e = jnp.exp(scores - m)
    p = e / jnp.sum(e, axis=-1, keepdims=True)
    attn = jnp.einsum("bhqk,bhkd->bhqd", p, v, precision=hp)
    concat = attn.transpose(0, 2, 1, 3).reshape(B, S, D)
    y = x + jnp.dot(concat, params["W_O"].T, precision=hp)

    g = rmsnorm(y, params["g2"])
    a = jnp.dot(g, params["W1"].T, precision=hp)
    b = jnp.dot(g, params["W3"].T, precision=hp)
    gated = (a * (1.0 / (1.0 + jnp.exp(-a)))) * b
    z = y + jnp.dot(gated, params["W2"].T, precision=hp)
    return z


def init_weight(key, out_features, in_features):
    """trunc_normal_(std=sqrt(2/(in+out)), a=-3std, b=3std), shape (out, in)."""
    std = math.sqrt(2.0 / (in_features + out_features))
    w = jax.random.truncated_normal(
        key, -3.0, 3.0, (out_features, in_features), dtype=jnp.float32) * std
    return w


if __name__ == "__main__":
    B, S, D, H, F = 2, 16, 128, 4, 256    # batch, seq, d_model, heads (dk=32), d_ff

    key = jax.random.PRNGKey(0)
    keys = jax.random.split(key, 8)
    x = jax.random.normal(keys[0], (B, S, D), dtype=jnp.float32)

    params = {
        "W_Q": init_weight(keys[1], D, D),
        "W_K": init_weight(keys[2], D, D),
        "W_V": init_weight(keys[3], D, D),
        "W_O": init_weight(keys[4], D, D),
        "W1": init_weight(keys[5], F, D),
        "W3": init_weight(keys[6], F, D),
        "W2": init_weight(keys[7], D, F),
        "g1": jnp.ones((D,), jnp.float32),
        "g2": jnp.ones((D,), jnp.float32),
        "g_qk": jnp.ones((D,), jnp.float32),
    }

    ref = jax.block_until_ready(transformer_block_reference(x, params, H))

    # fp32 path: exact module semantics.
    out_fp32 = transformer_block_pallas(
        x, params, H, compute_dtype=jnp.float32,
        block_rows=16, block_q=8, block_kv=8, block_ff=128, block_out_cols=128,
        approx_recip=False)
    out_fp32 = jax.block_until_ready(out_fp32)
    np.testing.assert_allclose(np.asarray(out_fp32), np.asarray(ref),
                               rtol=2e-2, atol=2e-2)

    # bf16-MXU / fp32-accumulate fast path (v6e/v7x perf configuration).
    out_bf16 = transformer_block_pallas(
        x, params, H, compute_dtype=jnp.bfloat16,
        block_rows=16, block_q=8, block_kv=8, block_ff=128, block_out_cols=128,
        approx_recip=True)
    out_bf16 = jax.block_until_ready(out_bf16)
    np.testing.assert_allclose(np.asarray(out_bf16), np.asarray(ref),
                               rtol=1.5e-1, atol=1.5e-1)

    print("KERNEL_OK")
</pallas_src>

<mosaic_0001>
module attributes {stable_mosaic.version = 11 : i64} {
  func.func @qkv_kernel(%arg0: i32, %arg1: i32, %arg2: memref<16x128xf32, #tpu.memory_space<vmem>>, %arg3: memref<1x128xf32, #tpu.memory_space<vmem>>, %arg4: memref<1x128xf32, #tpu.memory_space<vmem>>, %arg5: memref<1x128x128xf32, #tpu.memory_space<vmem>>, %arg6: memref<1x16x128xf32, #tpu.memory_space<vmem>>) attributes {dimension_semantics = [#tpu.dimension_semantics<parallel>, #tpu.dimension_semantics<parallel>], iteration_bounds = array<i64: 2, 3>, scalar_prefetch = 0 : i64, scratch_operands = 0 : i64, tpu.core_type = #tpu.core_type<tc>, window_params = [{transform_indices = @transform_0, window_bounds = array<i64: 16, 128>}, {pipeline_mode = #tpu.pipeline_mode<synchronous>, transform_indices = @transform_1, window_bounds = array<i64: 1, 128>}, {pipeline_mode = #tpu.pipeline_mode<synchronous>, transform_indices = @transform_2, window_bounds = array<i64: 1, 128>}, {transform_indices = @transform_3, window_bounds = array<i64: 1, 128, 128>}, {transform_indices = @transform_4, window_bounds = array<i64: 1, 16, 128>}]} {
    %c0 = arith.constant 0 : index
    %c0_0 = arith.constant 0 : index
    %0 = vector.load %arg2[%c0, %c0_0] : memref<16x128xf32, #tpu.memory_space<vmem>>, vector<16x128xf32>
    %c0_1 = arith.constant 0 : index
    %c0_2 = arith.constant 0 : index
    %1 = vector.load %arg3[%c0_1, %c0_2] : memref<1x128xf32, #tpu.memory_space<vmem>>, vector<1x128xf32>
    %2 = arith.mulf %0, %0 : vector<16x128xf32>
    %cst = arith.constant dense<0.000000e+00> : vector<16xf32>
    %3 = vector.multi_reduction <add>, %2, %cst [1] : vector<16x128xf32> to vector<16xf32>
    %4 = vector.shape_cast %3 : vector<16xf32> to vector<16x1xf32>
    %cst_3 = arith.constant 1.280000e+02 : f32
    %5 = vector.broadcast %cst_3 : f32 to vector<16x1xf32>
    %6 = arith.divf %4, %5 : vector<16x1xf32>
    %cst_4 = arith.constant 9.99999974E-6 : f32
    %7 = vector.broadcast %cst_4 : f32 to vector<16x1xf32>
    %8 = arith.addf %6, %7 : vector<16x1xf32>
    %9 = math.rsqrt %8 : vector<16x1xf32>
    %10 = vector.broadcast %9 : vector<16x1xf32> to vector<16x128xf32>
    %11 = arith.mulf %0, %10 : vector<16x128xf32>
    %12 = vector.broadcast %1 : vector<1x128xf32> to vector<16x128xf32>
    %13 = arith.mulf %11, %12 : vector<16x128xf32>
    %c0_5 = arith.constant 0 : index
    %c0_6 = arith.constant 0 : index
    %c0_7 = arith.constant 0 : index
    %14 = vector.load %arg5[%c0_5, %c0_6, %c0_7] : memref<1x128x128xf32, #tpu.memory_space<vmem>>, vector<1x128x128xf32>
    %15 = vector.shape_cast %14 : vector<1x128x128xf32> to vector<128x128xf32>
    %cst_8 = arith.constant dense<0.000000e+00> : vector<16x128xf32>
    %16 = tpu.matmul %13, %15, %cst_8 {dimension_numbers = #tpu.dot_dimension_numbers<[1], [0], [0], [1], [0, 0, 1, 1], [], []>} : vector<16x128xf32>, vector<128x128xf32>, vector<16x128xf32> -> vector<16x128xf32>
    %c2_i32 = arith.constant 2 : i32
    %17 = arith.cmpi slt, %arg1, %c2_i32 : i32
    %18 = arith.extui %17 : i1 to i32
    %c0_i32 = arith.constant 0 : i32
    %19 = arith.cmpi ne, %18, %c0_i32 : i32
    scf.if %19 {
      %c0_11 = arith.constant 0 : index
      %c0_12 = arith.constant 0 : index
      %23 = vector.load %arg4[%c0_11, %c0_12] : memref<1x128xf32, #tpu.memory_space<vmem>>, vector<1x128xf32>
      %24 = arith.mulf %16, %16 : vector<16x128xf32>
      %cst_13 = arith.constant dense<0.000000e+00> : vector<16xf32>
      %25 = vector.multi_reduction <add>, %24, %cst_13 [1] : vector<16x128xf32> to vector<16xf32>
      %26 = vector.shape_cast %25 : vector<16xf32> to vector<16x1xf32>
      %cst_14 = arith.constant 1.280000e+02 : f32
      %27 = vector.broadcast %cst_14 : f32 to vector<16x1xf32>
      %28 = arith.divf %26, %27 : vector<16x1xf32>
      %cst_15 = arith.constant 9.99999974E-6 : f32
      %29 = vector.broadcast %cst_15 : f32 to vector<16x1xf32>
      %30 = arith.addf %28, %29 : vector<16x1xf32>
      %31 = math.rsqrt %30 : vector<16x1xf32>
      %32 = vector.broadcast %31 : vector<16x1xf32> to vector<16x128xf32>
      %33 = arith.mulf %16, %32 : vector<16x128xf32>
      %34 = vector.broadcast %23 : vector<1x128xf32> to vector<16x128xf32>
      %35 = arith.mulf %33, %34 : vector<16x128xf32>
      %c0_i32_16 = arith.constant 0 : i32
      %36 = arith.cmpi eq, %arg1, %c0_i32_16 : i32
      %cst_17 = arith.constant 0.176776692 : f32
      %cst_18 = arith.constant 1.000000e+00 : f32
      %37 = arith.select %36, %cst_17, %cst_18 : f32
      %38 = vector.broadcast %37 : f32 to vector<16x128xf32>
      %39 = arith.mulf %35, %38 : vector<16x128xf32>
      %c0_19 = arith.constant 0 : index
      %c0_20 = arith.constant 0 : index
      %c0_21 = arith.constant 0 : index
      %40 = vector.load %arg6[%c0_19, %c0_20, %c0_21] : memref<1x16x128xf32, #tpu.memory_space<vmem>>, vector<1x16x128xf32>
      %41 = vector.shape_cast %40 : vector<1x16x128xf32> to vector<16x128xf32>
      %42 = vector.shape_cast %39 : vector<16x128xf32> to vector<1x16x128xf32>
      tpu.vector_store %arg6[%c0_19, %c0_20, %c0_21], %42 {strides = array<i32>} : memref<1x16x128xf32, #tpu.memory_space<vmem>>, vector<1x16x128xf32>,
    } else {
    }
    %c2_i32_9 = arith.constant 2 : i32
    %20 = arith.cmpi eq, %arg1, %c2_i32_9 : i32
    %21 = arith.extui %20 : i1 to i32
    %c0_i32_10 = arith.constant 0 : i32
    %22 = arith.cmpi ne, %21, %c0_i32_10 : i32
    scf.if %22 {
      %c0_11 = arith.constant 0 : index
      %c0_12 = arith.constant 0 : index
      %c0_13 = arith.constant 0 : index
      %23 = vector.load %arg6[%c0_11, %c0_12, %c0_13] : memref<1x16x128xf32, #tpu.memory_space<vmem>>, vector<1x16x128xf32>
      %24 = vector.shape_cast %23 : vector<1x16x128xf32> to vector<16x128xf32>
      %25 = vector.shape_cast %16 : vector<16x128xf32> to vector<1x16x128xf32>
      tpu.vector_store %arg6[%c0_11, %c0_12, %c0_13], %25 {strides = array<i32>} : memref<1x16x128xf32, #tpu.memory_space<vmem>>, vector<1x16x128xf32>,
    } else {
    }
    return
  }
  func.func @transform_0(%arg0: i32, %arg1: i32) -> (i32, i32) {
    %c0_i32 = arith.constant 0 : i32
    %c0_i32_0 = arith.constant 0 : i32
    return %arg0, %c0_i32 : i32, i32
  }
  func.func @transform_1(%arg0: i32, %arg1: i32) -> (i32, i32) {
    %c0_i32 = arith.constant 0 : i32
    %c0_i32_0 = arith.constant 0 : i32
    %c0_i32_1 = arith.constant 0 : i32
    return %c0_i32, %c0_i32_0 : i32, i32
  }
  func.func @transform_2(%arg0: i32, %arg1: i32) -> (i32, i32) {
    %c0_i32 = arith.constant 0 : i32
    %c0_i32_0 = arith.constant 0 : i32
    %c0_i32_1 = arith.constant 0 : i32
    return %c0_i32, %c0_i32_0 : i32, i32
  }
  func.func @transform_3(%arg0: i32, %arg1: i32) -> (i32, i32, i32) {
    %c0_i32 = arith.constant 0 : i32
    %c0_i32_0 = arith.constant 0 : i32
    %c0_i32_1 = arith.constant 0 : i32
    return %arg1, %c0_i32, %c0_i32_0 : i32, i32, i32
  }
  func.func @transform_4(%arg0: i32, %arg1: i32) -> (i32, i32, i32) {
    %c0_i32 = arith.constant 0 : i32
    %c0_i32_0 = arith.constant 0 : i32
    return %arg1, %arg0, %c0_i32 : i32, i32, i32
  }
}

</mosaic_0001>

<llo_original>
// kernel: tpu_custom_call.1
$region0: #{tpu_custom_call.1}
  #allocation0 [shape = 'u32[]', space=smem, size = 0x4, offset = 0x4, fixed_abs, tag = 'smem constant byte address 0x4 - core index']
  #allocation1 [shape = 'u32[72,128]{1,0:T(1,128)}', space=vmem, size = 0x9000, scoped, tag = 'internal scratch']
  %s0 = inlined_call_operand.hbm [shape: f32[32,128], index: 0, kind: input, shape index: {}]
  %s1 = inlined_call_operand.hbm [shape: f32[1,128], index: 1, kind: input, shape index: {}]
  %s2 = inlined_call_operand.vmem [shape: f32[1,128], index: 2, kind: input, shape index: {}]
  %s3 = inlined_call_operand.hbm [shape: f32[3,128,128], index: 3, kind: input, shape index: {}]
  %s4 = inlined_call_operand.hbm [shape: f32[3,32,128], index: 4, kind: output, shape index: {}]
  %s5 = sld [smem:[#allocation0]]
  $region69: #{tpu_custom_call.1} parent=0
    _
  %s7 = ssub.s32 1, %s5
  %s8 = scalar_select 0, %s7, %s5
  $region1: #{tpu_custom_call.1} parent=0
    #allocation2 [shape = 'u8[16384]{0}', space=vmem, size = 0x4000, scoped, tag = 'input window, operand 0']
    #allocation3 [shape = 's32[2]{0}', space=sflag, size = 0x8, scoped, tag = 'scoped memory for tpu_custom_call.1']
    #allocation4 [shape = 's32[2]{0}', space=sflag, size = 0x8, scoped, tag = 'scoped memory for tpu_custom_call.1']
    #allocation5 [shape = 'u8[512]{0}', space=vmem, size = 0x400, scoped, tag = 'input window, operand 1, single buffered']
    #allocation6 [shape = 's32[1]{0}', space=sflag, size = 0x4, scoped, tag = 'scoped memory for tpu_custom_call.1']
    #allocation7 [shape = 'u8[131072]{0}', space=vmem, size = 0x20000, scoped, tag = 'input window, operand 3']
    #allocation8 [shape = 'u8[16384]{0}', space=vmem, size = 0x4000, scoped, tag = 'output window, operand 0']
    %9 = vsyncpa [#allocation3], 0
    %s10 = scalar_lea.sflag [#allocation3], 1
    %11 = vsyncpa %s10, 0
    %12 = vsyncpa [#allocation6], 0
    %13 = vsyncpa [#allocation4], 0
    %s14 = scalar_lea.sflag [#allocation4], 1
    %15 = vsyncpa %s14, 0
    loop: start=0, step=1, limit=8
    $region2: #{tpu_custom_call.1} parent=1 // loop_pre_header
      _
    $region3: #{tpu_custom_call.1} parent=1 // loop_header
      %s17 = sphi 0, %s21
      %p18 = scmp.ge.s32.totalorder %s17, 8
      %s24 = sphi 0, %s36
      %s25 = sphi 0, %s32
      %s26 = sphi 0, %s24
      %s27 = sphi 0, %s25
      %s28 = sphi 0, %s26
      %s29 = sphi 0, %s27
      %s39 = sphi 0, %s41
      %s42 = sphi 0, %s39
      %s43 = sphi 0, %s42
      %s59 = sphi 0, %s43
      %s63 = sphi 0, %s63
      %s65 = sphi 0, %s63
      %s66 = sphi 0, %s65
      %s80 = sphi 0, %s66
      %s84 = sphi 0, %s84
      %s86 = sphi 0, %s84
      %s87 = sphi 0, %s86
      %s101 = sphi 0, %s87
      %s107 = sphi 0, %s109
      %s110 = sphi 0, %s107
      %s111 = sphi 0, %s110
      %s127 = sphi 0, %s111
      %s135 = sphi 0, %s137
      %s138 = sphi 0, %s135
      %s139 = sphi 0, %s138
      %s155 = sphi 0, %s139
    $region4: #{tpu_custom_call.1} parent=1 // loop_header_branch
      %20 = sbr.rel (%p18) target = $region8
    $region5: #{tpu_custom_call.1} parent=1 // loop_body
      %s22 = ssub.s32 %s17, 1
      %s23 = ssub.s32 %s17, 2
      %s30 = sadd.s32 1, %s25
      %p31 = scmp.ge.s32.totalorder %s30, 3
      %s32 = scalar_select %p31, 0, %s30
      %s33 = sadd.s32 1, %s24
      %s34 = scalar_select %p31, %s33, %s24
      %p35 = scmp.ge.s32.totalorder %s34, 2
      %s36 = scalar_select %p35, 0, %s34
      %s37 = ssub.s32 %s24, %s36
      %p38 = scmp.eq.s32.totalorder %s37, 0
      %s40 = sadd.s32 %s39, 1
      %s41 = scalar_select %p38, %s39, %s40
      %p44 = pneg %p38
      %p45 = scmp.eq.s32.totalorder %s17, 5
      %p46 = por %p44, %p45
      %p47 = scmp.ne.s32.totalorder %s39, %s42
      %p48 = scmp.eq.s32.totalorder %s17, 0
      %p49 = por %p47, %p48
      %p50 = scmp.ne.s32.totalorder %s39, %s42
      %p51 = scmp.eq.s32.totalorder %s22, 5
      %p52 = por %p50, %p51
      %p53 = scmp.ne.s32.totalorder %s42, %s43
      %p54 = scmp.eq.s32.totalorder %s22, 0
      %p55 = por %p53, %p54
      %p56 = scmp.ne.s32.totalorder %s42, %s43
      %p57 = scmp.eq.s32.totalorder %s23, 5
      %p58 = por %p56, %p57
      %p60 = scmp.ne.s32.totalorder %s43, %s59
      %p61 = scmp.eq.s32.totalorder %s23, 0
      %p62 = por %p60, %p61
      %s64 = sadd.s32 %s63, 1
      %p67 = scmp.eq.s32.totalorder %s17, 5
      %p68 = scmp.ne.s32.totalorder %s63, %s65
      %p69 = scmp.eq.s32.totalorder %s17, 0
      %p70 = por %p68, %p69
      %p71 = scmp.ne.s32.totalorder %s63, %s65
      %p72 = scmp.eq.s32.totalorder %s22, 5
      %p73 = por %p71, %p72
      %p74 = scmp.ne.s32.totalorder %s65, %s66
      %p75 = scmp.eq.s32.totalorder %s22, 0
      %p76 = por %p74, %p75
      %p77 = scmp.ne.s32.totalorder %s65, %s66
      %p78 = scmp.eq.s32.totalorder %s23, 5
      %p79 = por %p77, %p78
      %p81 = scmp.ne.s32.totalorder %s66, %s80
      %p82 = scmp.eq.s32.totalorder %s23, 0
      %p83 = por %p81, %p82
      %s85 = sadd.s32 %s84, 1
      %p88 = scmp.eq.s32.totalorder %s17, 5
      %p89 = scmp.ne.s32.totalorder %s84, %s86
      %p90 = scmp.eq.s32.totalorder %s17, 0
      %p91 = por %p89, %p90
      %p92 = scmp.ne.s32.totalorder %s84, %s86
      %p93 = scmp.eq.s32.totalorder %s22, 5
      %p94 = por %p92, %p93
      %p95 = scmp.ne.s32.totalorder %s86, %s87
      %p96 = scmp.eq.s32.totalorder %s22, 0
      %p97 = por %p95, %p96
      %p98 = scmp.ne.s32.totalorder %s86, %s87
      %p99 = scmp.eq.s32.totalorder %s23, 5
      %p100 = por %p98, %p99
      %p102 = scmp.ne.s32.totalorder %s87, %s101
      %p103 = scmp.eq.s32.totalorder %s23, 0
      %p104 = por %p102, %p103
      %s105 = ssub.s32 %s25, %s32
      %p106 = scmp.eq.s32.totalorder %s105, 0
      %s108 = sadd.s32 %s107, 1
      %s109 = scalar_select %p106, %s107, %s108
      %p112 = pneg %p106
      %p113 = scmp.eq.s32.totalorder %s17, 5
      %p114 = por %p112, %p113
      %p115 = scmp.ne.s32.totalorder %s107, %s110
      %p116 = scmp.eq.s32.totalorder %s17, 0
      %p117 = por %p115, %p116
      %p118 = scmp.ne.s32.totalorder %s107, %s110
      %p119 = scmp.eq.s32.totalorder %s22, 5
      %p120 = por %p118, %p119
      %p121 = scmp.ne.s32.totalorder %s110, %s111
      %p122 = scmp.eq.s32.totalorder %s22, 0
      %p123 = por %p121, %p122
      %p124 = scmp.ne.s32.totalorder %s110, %s111
      %p125 = scmp.eq.s32.totalorder %s23, 5
      %p126 = por %p124, %p125
      %p128 = scmp.ne.s32.totalorder %s111, %s127
      %p129 = scmp.eq.s32.totalorder %s23, 0
      %p130 = por %p128, %p129
      %s131 = ssub.s32 %s25, %s32
      %s132 = ssub.s32 %s24, %s36
      %s133 = sor.u32 %s131, %s132
      %p134 = scmp.eq.s32.totalorder %s133, 0
      %s136 = sadd.s32 %s135, 1
      %s137 = scalar_select %p134, %s135, %s136
      %p140 = pneg %p134
      %p141 = scmp.eq.s32.totalorder %s17, 5
      %p142 = por %p140, %p141
      %p143 = scmp.ne.s32.totalorder %s135, %s138
      %p144 = scmp.eq.s32.totalorder %s17, 0
      %p145 = por %p143, %p144
      %p146 = scmp.ne.s32.totalorder %s135, %s138
      %p147 = scmp.eq.s32.totalorder %s22, 5
      %p148 = por %p146, %p147
      %p149 = scmp.ne.s32.totalorder %s138, %s139
      %p150 = scmp.eq.s32.totalorder %s22, 0
      %p151 = por %p149, %p150
      %p152 = scmp.ne.s32.totalorder %s138, %s139
      %p153 = scmp.eq.s32.totalorder %s23, 5
      %p154 = por %p152, %p153
      %p156 = scmp.ne.s32.totalorder %s139, %s155
      %p157 = scmp.eq.s32.totalorder %s23, 0
      %p158 = por %p156, %p157
      %p159 = scmp.le.s32.totalorder 1, %s17
      %p160 = scmp.lt.s32.totalorder %s17, 7
      %p161 = pnand %p159, %p160
      %p162 = pneg %p161
      // Predicated region
      $region9: #{tpu_custom_call.1} parent=5 // pred_check
        _
      $region10: #{tpu_custom_call.1} parent=5 // pred_check_branch
        %164 = sbr.rel (%p161) target = $region12
      $region11: #{tpu_custom_call.1} parent=5 // pred_region
        %s165 = ssub.s32 %s17, 1
        // Predicated region
        $region13: #{tpu_custom_call.1} parent=11 // pred_check
          %p166 = pneg %p76
        $region14: #{tpu_custom_call.1} parent=11 // pred_check_branch
          %168 = sbr.rel (%p166) target = $region16
        $region15: #{tpu_custom_call.1} parent=11 // pred_region
          %170 = vsyncadd [#allocation6], 0
          %s172 = sshll.u32 %s1, 4
          %s173 = int_to_ptr.hbm [resolvable:$true] %s172
          %s174 = sshll.u32 [#allocation5], 4
          %s175 = int_to_ptr.vmem [resolvable:$true] %s174
          %177 = dma.hbm_to_vmem [thread:$0]  %s173, 16, %s175, [#allocation6]
        $region16: #{tpu_custom_call.1} parent=11 // pred_fallthru
          _
        // Predicated region
        $region17: #{tpu_custom_call.1} parent=11 // pred_check
          %p178 = pneg %p97
        $region18: #{tpu_custom_call.1} parent=11 // pred_check_branch
          %180 = sbr.rel (%p178) target = $region20
        $region19: #{tpu_custom_call.1} parent=11 // pred_region
          _
        $region20: #{tpu_custom_call.1} parent=11 // pred_fallthru
          _
      $region12: #{tpu_custom_call.1} parent=5 // pred_fallthru
        _
      %p181 = scmp.lt.s32.totalorder %s17, 6
      // Predicated region
      $region21: #{tpu_custom_call.1} parent=5 // pred_check
        %p182 = pneg %p181
      $region22: #{tpu_custom_call.1} parent=5 // pred_check_branch
        %184 = sbr.rel (%p182) target = $region24
      $region23: #{tpu_custom_call.1} parent=5 // pred_region
        // Predicated region
        $region25: #{tpu_custom_call.1} parent=23 // pred_check
          %p185 = pneg %p49
        $region26: #{tpu_custom_call.1} parent=23 // pred_check_branch
          %187 = sbr.rel (%p185) target = $region28
        $region27: #{tpu_custom_call.1} parent=23 // pred_region
          %s188 = sand.u32 %s17, 1
          %s189 = scalar_lea.sflag [#allocation3], %s188
          %s190 = sand.u32 %s39, 1
          %s191 = smul.addr %s190, 16
          %s192 = scalar_lea.vmem [#allocation2], %s191
          %s193 = smul.u32 2, %s24
          %195 = vsyncadd %s189, 0
          %s196 = smul.addr %s193, 8
          %s197 = scalar_lea.hbm %s0, %s196
          %s198 = sshll.u32 %s197, 4
          %s199 = int_to_ptr.hbm [resolvable:$true] %s198
          %s200 = sshll.u32 %s192, 4
          %s201 = int_to_ptr.vmem [resolvable:$true] %s200
          %206 = dma.hbm_to_vmem [thread:$0]  %s199, 256, %s201, %s189, 128, 128, 8
        $region28: #{tpu_custom_call.1} parent=23 // pred_fallthru
          _
        // Predicated region
        $region29: #{tpu_custom_call.1} parent=23 // pred_check
          %p207 = pneg %p117
        $region30: #{tpu_custom_call.1} parent=23 // pred_check_branch
          %209 = sbr.rel (%p207) target = $region32
        $region31: #{tpu_custom_call.1} parent=23 // pred_region
          %s210 = sand.u32 %s17, 1
          %s211 = scalar_lea.sflag [#allocation3], %s210
          %s212 = sand.u32 %s107, 1
          %s213 = smul.addr %s212, 128
          %s214 = scalar_lea.vmem [#allocation7], %s213
          %216 = vsyncadd %s211, 0
          %s217 = smul.addr %s25, 16
          %s218 = smul.addr %s217, 8
          %s219 = scalar_lea.hbm %s3, %s218
          %s220 = sshll.u32 %s219, 4
          %s221 = int_to_ptr.hbm [resolvable:$true] %s220
          %s222 = sshll.u32 %s214, 4
          %s223 = int_to_ptr.vmem [resolvable:$true] %s222
          %228 = dma.hbm_to_vmem [thread:$0]  %s221, 2048, %s223, %s211, 128, 128, 8
        $region32: #{tpu_custom_call.1} parent=23 // pred_fallthru
          _
      $region24: #{tpu_custom_call.1} parent=5 // pred_fallthru
        _
      %p229 = scmp.le.s32.totalorder 1, %s17
      %p230 = scmp.lt.s32.totalorder %s17, 7
      %p231 = pnand %p229, %p230
      %p232 = pneg %p231
      // Predicated region
      $region33: #{tpu_custom_call.1} parent=5 // pred_check
        _
      $region34: #{tpu_custom_call.1} parent=5 // pred_check_branch
        %234 = sbr.rel (%p231) target = $region36
      $region35: #{tpu_custom_call.1} parent=5 // pred_region
        %s235 = ssub.s32 %s17, 1
        %s236 = sand.u32 %s22, 1
        %s237 = scalar_lea.sflag [#allocation3], %s236
        %s238 = sand.u32 %s42, 1
        %s239 = smul.addr %s238, 16
        %s240 = scalar_lea.vmem [#allocation2], %s239
        // Predicated region
        $region37: #{tpu_custom_call.1} parent=35 // pred_check
          %p241 = pneg %p55
        $region38: #{tpu_custom_call.1} parent=35 // pred_check_branch
          %243 = sbr.rel (%p241) target = $region40
        $region39: #{tpu_custom_call.1} parent=35 // pred_region
          %245 = dma.done %s237, 256
        $region40: #{tpu_custom_call.1} parent=35 // pred_fallthru
          _
        // Predicated region
        $region41: #{tpu_custom_call.1} parent=35 // pred_check
          %p246 = pneg %p76
        $region42: #{tpu_custom_call.1} parent=35 // pred_check_branch
          %248 = sbr.rel (%p246) target = $region44
        $region43: #{tpu_custom_call.1} parent=35 // pred_region
          %250 = dma.done [#allocation6], 16
        $region44: #{tpu_custom_call.1} parent=35 // pred_fallthru
          _
        %s251 = sand.u32 %s22, 1
        %s252 = scalar_lea.sflag [#allocation3], %s251
        %s253 = sand.u32 %s110, 1
        %s254 = smul.addr %s253, 128
        %s255 = scalar_lea.vmem [#allocation7], %s254
        // Predicated region
        $region45: #{tpu_custom_call.1} parent=35 // pred_check
          %p256 = pneg %p123
        $region46: #{tpu_custom_call.1} parent=35 // pred_check_branch
          %258 = sbr.rel (%p256) target = $region48
        $region47: #{tpu_custom_call.1} parent=35 // pred_region
          %260 = dma.done %s252, 2048
        $region48: #{tpu_custom_call.1} parent=35 // pred_fallthru
          _
        %s261 = sand.u32 %s22, 1
        %s262 = scalar_lea.sflag [#allocation3], %s261
        %s263 = sand.u32 %s42, 1
        %s264 = smul.addr %s263, 16
        %s265 = scalar_lea.vmem [#allocation2], %s264
        %p266 = pneg %p55
        %p267 = pneg %p52
        %p268 = pneg %p76
        %p269 = pneg %p73
        %p270 = pneg %p97
        %p271 = pneg %p94
        %s272 = sand.u32 %s22, 1
        %s273 = scalar_lea.sflag [#allocation3], %s272
        %s274 = sand.u32 %s110, 1
        %s275 = smul.addr %s274, 128
        %s276 = scalar_lea.vmem [#allocation7], %s275
        %p277 = pneg %p123
        %p278 = pneg %p120
        %p279 = pneg %p151
        %p280 = pneg %p148
        %s281 = sand.u32 %s138, 1
        %s282 = scalar_lea.sflag [#allocation4], %s281
        %s283 = sand.u32 %s138, 1
        %s284 = smul.addr %s283, 16
        %s285 = scalar_lea.vmem [#allocation8], %s284
        %s286 = smul.u32 2, %s26
        %s287 = smul.u32 2, %s26
        %v288 = vld [vmem:[%s240] sm:$0xff]
        %v289 = vld [vmem:[%s240 + $0x8] sm:$0xff]
        %v290 = vld [vmem:[#allocation5] sm:$0x1]
        %v291 = vmul.f32 %v288, %v288
        %v292 = vmul.f32 %v289, %v289
        %293 = vadd.xlane.f32.xlu0 %v291
        %v294 = vpop.xlane.xlu0 %293
        %295 = vadd.xlane.f32.xlu0 %v292
        %v296 = vpop.xlane.xlu0 %295
        %v297 = vrcp.pop 128.0
        %v298 = vmul.f32 128.0, %v297
        %v299 = vsub.f32 1.0, %v298
        %v300 = vmul.f32 %v297, %v299
        %v301 = vadd.f32 %v297, %v300
        %vm302 = vweird.f32 %v297
        %v303 = vsel %vm302, %v297, %v301
        %v304 = vmul.f32 %v294, %v303
        %v305 = vmul.f32 %v296, %v303
        %v306 = vadd.f32 %v304, 1e-05
        %v307 = vadd.f32 %v305, 1e-05
        %v308 = vrsqrt.pop %v306
        %v309 = vmul.f32 %v308, %v306
        %v310 = vmul.f32 %v309, %v308
        %v311 = vmul.f32 0.5, %v310
        %v312 = vsub.f32 1.5, %v311
        %v313 = vmul.f32 %v308, %v312
        %vm314 = vweird.f32 %v306
        %vm315 = vweird.f32 %v308
        %vm316 = vmor %vm314, %vm315
        %v317 = vsel %vm316, %v308, %v313
        %v318 = vrsqrt.pop %v307
        %v319 = vmul.f32 %v318, %v307
        %v320 = vmul.f32 %v319, %v318
        %v321 = vmul.f32 0.5, %v320
        %v322 = vsub.f32 1.5, %v321
        %v323 = vmul.f32 %v318, %v322
        %vm324 = vweird.f32 %v307
        %vm325 = vweird.f32 %v318
        %vm326 = vmor %vm324, %vm325
        %v327 = vsel %vm326, %v318, %v323
        %v328 = vmul.f32 %v288, %v317
        %v329 = vmul.f32 %v289, %v327
        %v331 = vperm.slane %v290, 0
        %v333 = vmul.f32 %v328, %v331
        %v334 = vmul.f32 %v329, %v331
        %v335 = vld [vmem:[%s255] sm:$0xff]
        %v336 = vld [vmem:[%s255 + $0x8] sm:$0xff]
        %v337 = vld [vmem:[%s255 + $0x10] sm:$0xff]
        %v338 = vld [vmem:[%s255 + $0x18] sm:$0xff]
        %v339 = vld [vmem:[%s255 + $0x20] sm:$0xff]
        %v340 = vld [vmem:[%s255 + $0x28] sm:$0xff]
        %v341 = vld [vmem:[%s255 + $0x30] sm:$0xff]
        %v342 = vld [vmem:[%s255 + $0x38] sm:$0xff]
        %v343 = vld [vmem:[%s255 + $0x40] sm:$0xff]
        %v344 = vld [vmem:[%s255 + $0x48] sm:$0xff]
        %v345 = vld [vmem:[%s255 + $0x50] sm:$0xff]
        %v346 = vld [vmem:[%s255 + $0x58] sm:$0xff]
        %v347 = vld [vmem:[%s255 + $0x60] sm:$0xff]
        %v348 = vld [vmem:[%s255 + $0x68] sm:$0xff]
        %v349 = vld [vmem:[%s255 + $0x70] sm:$0xff]
        %v350 = vld [vmem:[%s255 + $0x78] sm:$0xff]
        %351 = vmatpush.msra.mxu0 %v350
        %352 = vmatpush.msra.mxu0 %v349
        %353 = vmatpush.msra.mxu0 %v348
        %354 = vmatpush.msra.mxu0 %v347
        %355 = vmatpush.msra.mxu0 %v346
        %356 = vmatpush.msra.mxu0 %v345
        %357 = vmatpush.msra.mxu0 %v344
        %358 = vmatpush.msra.mxu0 %v343
        %359 = vmatpush.msra.mxu0 %v342
        %360 = vmatpush.msra.mxu0 %v341
        %361 = vmatpush.msra.mxu0 %v340
        %362 = vmatpush.msra.mxu0 %v339
        %363 = vmatpush.msra.mxu0 %v338
        %364 = vmatpush.msra.mxu0 %v337
        %365 = vmatpush.msra.mxu0 %v336
        %366 = vmatpush.msra.mxu0 %v335
        %367 = vmatmul.f32.gmra.mxu0 %v333
        %v368 = vpop.f32.mrf.mxu0
        %v369 = vadd.f32 0.0, %v368
        %370 = vmatmul.f32.gmra.mxu0 %v334
        %v371 = vpop.f32.mrf.mxu0
        %v372 = vadd.f32 0.0, %v371
        %373 = vdwg.mxu0
        %p374 = scmp.lt.s32.totalorder %s27, 2
        // Predicated region
        $region49: #{tpu_custom_call.1} parent=35 // pred_check
          %p375 = pneg %p374
        $region50: #{tpu_custom_call.1} parent=35 // pred_check_branch
          %377 = sbr.rel (%p375) target = $region52
        $region51: #{tpu_custom_call.1} parent=35 // pred_region
          %v378 = vld [vmem:[%s2] sm:$0x1]
          %v379 = vmul.f32 %v369, %v369
          %v380 = vmul.f32 %v372, %v372
          %381 = vadd.xlane.f32.xlu0 %v379
          %v382 = vpop.xlane.xlu0 %381
          %383 = vadd.xlane.f32.xlu0 %v380
          %v384 = vpop.xlane.xlu0 %383
          %v385 = vmul.f32 %v382, %v303
          %v386 = vmul.f32 %v384, %v303
          %v387 = vadd.f32 %v385, 1e-05
          %v388 = vadd.f32 %v386, 1e-05
          %v389 = vrsqrt.pop %v387
          %v390 = vmul.f32 %v389, %v387
          %v391 = vmul.f32 %v390, %v389
          %v392 = vmul.f32 0.5, %v391
          %v393 = vsub.f32 1.5, %v392
          %v394 = vmul.f32 %v389, %v393
          %vm395 = vweird.f32 %v387
          %vm396 = vweird.f32 %v389
          %vm397 = vmor %vm395, %vm396
          %v398 = vsel %vm397, %v389, %v394
          %v399 = vrsqrt.pop %v388
          %v400 = vmul.f32 %v399, %v388
          %v401 = vmul.f32 %v400, %v399
          %v402 = vmul.f32 0.5, %v401
          %v403 = vsub.f32 1.5, %v402
          %v404 = vmul.f32 %v399, %v403
          %vm405 = vweird.f32 %v388
          %vm406 = vweird.f32 %v399
          %vm407 = vmor %vm405, %vm406
          %v408 = vsel %vm407, %v399, %v404
          %v409 = vmul.f32 %v369, %v398
          %v410 = vmul.f32 %v372, %v408
          %v412 = vperm.slane %v378, 0
          %v414 = vmul.f32 %v409, %v412
          %v415 = vmul.f32 %v410, %v412
          %p416 = scmp.eq.s32.totalorder %s27, 0
          %s417 = scalar_select %p416, 0.17677669, 1.0
          %v418 = vstv %s417
          %v419 = vmul.f32 %v414, %v418
          %v420 = vmul.f32 %v415, %v418
          %421 = vst [vmem:[%s285] sm:$0xff] %v419
          %422 = vst [vmem:[%s285 + $0x8] sm:$0xff] %v420
        $region52: #{tpu_custom_call.1} parent=35 // pred_fallthru
          _
        %p423 = scmp.eq.s32.totalorder %s27, 2
        // Predicated region
        $region53: #{tpu_custom_call.1} parent=35 // pred_check
          %p424 = pneg %p423
        $region54: #{tpu_custom_call.1} parent=35 // pred_check_branch
          %426 = sbr.rel (%p424) target = $region56
        $region55: #{tpu_custom_call.1} parent=35 // pred_region
          %427 = vst [vmem:[%s285] sm:$0xff] %v369
          %428 = vst [vmem:[%s285 + $0x8] sm:$0xff] %v372
        $region56: #{tpu_custom_call.1} parent=35 // pred_fallthru
          _
        %s429 = sand.u32 %s138, 1
        %s430 = scalar_lea.sflag [#allocation4], %s429
        %s431 = sand.u32 %s138, 1
        %s432 = smul.addr %s431, 16
        %s433 = scalar_lea.vmem [#allocation8], %s432
        // Predicated region
        $region57: #{tpu_custom_call.1} parent=35 // pred_check
          %p434 = pneg %p148
        $region58: #{tpu_custom_call.1} parent=35 // pred_check_branch
          %436 = sbr.rel (%p434) target = $region60
        $region59: #{tpu_custom_call.1} parent=35 // pred_region
          %s437 = smul.u32 2, %s26
          %439 = vsyncadd %s430, 0
          %s440 = smul.addr %s27, 4
          %s441 = sadd.s32 %s437, %s440
          %s442 = smul.addr %s441, 8
          %s443 = scalar_lea.hbm %s4, %s442
          %s444 = sshll.u32 %s433, 4
          %s445 = int_to_ptr.vmem [resolvable:$true] %s444
          %s446 = sshll.u32 %s443, 4
          %s447 = int_to_ptr.hbm [resolvable:$true] %s446
          %452 = dma.vmem_to_hbm [thread:$0]  %s445, 256, %s447, %s430, 128, 128, 8
        $region60: #{tpu_custom_call.1} parent=35 // pred_fallthru
          _
      $region36: #{tpu_custom_call.1} parent=5 // pred_fallthru
        _
      %p453 = scmp.le.s32.totalorder 2, %s17
      // Predicated region
      $region61: #{tpu_custom_call.1} parent=5 // pred_check
        %p454 = pneg %p453
      $region62: #{tpu_custom_call.1} parent=5 // pred_check_branch
        %456 = sbr.rel (%p454) target = $region64
      $region63: #{tpu_custom_call.1} parent=5 // pred_region
        %s457 = ssub.s32 %s17, 2
        // Predicated region
        $region65: #{tpu_custom_call.1} parent=63 // pred_check
          %p458 = pneg %p154
        $region66: #{tpu_custom_call.1} parent=63 // pred_check_branch
          %460 = sbr.rel (%p458) target = $region68
        $region67: #{tpu_custom_call.1} parent=63 // pred_region
          %s461 = sand.u32 %s139, 1
          %s462 = scalar_lea.sflag [#allocation4], %s461
          %s463 = sand.u32 %s139, 1
          %s464 = smul.addr %s463, 16
          %s465 = scalar_lea.vmem [#allocation8], %s464
          %467 = dma.done %s462, 256
        $region68: #{tpu_custom_call.1} parent=63 // pred_fallthru
          _
      $region64: #{tpu_custom_call.1} parent=5 // pred_fallthru
        _
    $region6: #{tpu_custom_call.1} parent=1 // loop_footer
      %s21 = sadd.s32 1, %s17
    $region7: #{tpu_custom_call.1} parent=1 // loop_footer_branch
      %16 = sbr.rel target = $region3
    $region8: #{tpu_custom_call.1} parent=1 // loop_exit
      _
    %468 = vsyncpa [#allocation3], 1
    %s469 = scalar_lea.sflag [#allocation3], 1
    %470 = vsyncpa %s469, 1
    %471 = vsyncpa [#allocation6], 1
    %472 = vsyncpa [#allocation4], 1
    %s473 = scalar_lea.sflag [#allocation4], 1
    %474 = vsyncpa %s473, 1

</llo_original>
